<compile_context>
chip_gen: v6e
topology: v6e:2x2x1
jax: 0.10.0
libtpu: 0.0.40
codegen_flags: <defaults>
</compile_context>

<pallas_src>
import functools

import jax
import jax.numpy as jnp
from jax.experimental import pallas as pl
from jax.experimental.pallas import tpu as pltpu

_LANE = 128


def _round_up(x, m):
    return ((x + m - 1) // m) * m


def _vmem_limit_bytes():
    # Per-generation scoped-VMEM budget: ~3/4 of physical capacity
    # (v5e/v6e 128 MiB -> 96 MiB; v7x 64 MiB per TC -> 48 MiB), capped at 100 MiB.
    try:
        cap = pltpu.get_tpu_info().vmem_capacity_bytes
    except Exception:
        cap = 64 << 20
    return int(max(32 << 20, min(100 << 20, (cap * 3) // 4)))


# ----------------------------------------------------------------------------
# Fused base model (MLP + tiled LM head) + online-softmax shifted CE
# ----------------------------------------------------------------------------
def _fused_base_ce_kernel(x_ref, lab_ref, w1_ref, b1_ref, wv_ref, bv_ref,
                          h_ref, logits_ref, tileloss_ref,
                          h_sc, m_sc, l_sc, ll_sc):
    v = pl.program_id(1)
    nv = pl.num_programs(1)
    tv = wv_ref.shape[1]

    @pl.when(v == 0)
    def _():
        # First matmul + GELU: once per token tile, cached for all vocab tiles.
        h = jnp.dot(x_ref[...], w1_ref[...], preferred_element_type=jnp.float32)
        h = jax.nn.gelu(h + b1_ref[...], approximate=True)   # f32 math
        h_bf = h.astype(jnp.bfloat16)
        h_sc[...] = h_bf
        h_ref[...] = h_bf
        # Online-softmax CE state.
        m_sc[...] = jnp.full(m_sc.shape, -jnp.inf, jnp.float32)
        l_sc[...] = jnp.zeros(l_sc.shape, jnp.float32)
        ll_sc[...] = jnp.zeros(ll_sc.shape, jnp.float32)

    # LM-head slice for the current vocab tile (bf16 MXU, f32 accumulation).
    logits = jnp.dot(h_sc[...], wv_ref[...],
                     preferred_element_type=jnp.float32) + bv_ref[...]
    logits_ref[...] = logits.astype(logits_ref.dtype)         # bf16 writeback

    labels = lab_ref[...]                                     # (T, 1) int32
    m_old = m_sc[...]
    m_new = jnp.maximum(m_old, jnp.max(logits, axis=-1, keepdims=True))
    alpha = jnp.exp(m_old - m_new)
    l_sc[...] = alpha * l_sc[...] + jnp.sum(jnp.exp(logits - m_new),
                                            axis=-1, keepdims=True)
    col = jax.lax.broadcasted_iota(jnp.int32, logits.shape, 1) + v * tv
    ll_sc[...] += jnp.sum(jnp.where(col == labels, logits, 0.0),
                          axis=-1, keepdims=True)
    m_sc[...] = m_new

    @pl.when(v == nv - 1)
    def _():
        # Rows with label < 0 (memory tokens, last token, padding) contribute 0.
        rowloss = jnp.where(labels >= 0,
                            m_sc[...] + jnp.log(l_sc[...]) - ll_sc[...],
                            0.0)
        # Lane-dense per-tile partial sum; reduced across tiles in the wrapper.
        tileloss_ref[...] = jnp.full(tileloss_ref.shape, jnp.sum(rowloss),
                                     jnp.float32)


def base_model_with_loss(x2d, labels, w1, b1, wv, bv, *,
                         tile_n=256, tile_v=512):
    """x2d:(N,H), labels:(N,) int32 (label < 0 => ignore).

    Returns (hidden:(N,H) bf16, logits:(N,V) bf16, mean_loss:() f32).
    """
    N, H = x2d.shape
    V = wv.shape[1]

    tile_n = _round_up(min(tile_n, _round_up(N, 8)), 8)
    n_pad = _round_up(N, tile_n)
    x2d = x2d.astype(jnp.bfloat16)                 # ship bf16; compute f32 acc
    if n_pad != N:
        # TODO(synk): at production sizes pick tile_n | N (num_mem_tokens is a
        # free knob) so this extra HBM round trip disappears.
        x2d = jnp.pad(x2d, ((0, n_pad - N), (0, 0)))
        labels = jnp.pad(labels, (0, n_pad - N), constant_values=-1)
    labels2d = labels.reshape(n_pad, 1).astype(jnp.int32)

    tv = min(tile_v, V)
    if V % tv:
        tv = V
    n_tiles = n_pad // tile_n
    v_tiles = V // tv

    w1_bf = w1.astype(jnp.bfloat16)
    wv_bf = wv.astype(jnp.bfloat16)
    b1_2d = b1.reshape(1, H).astype(jnp.float32)
    bv_2d = bv.reshape(1, V).astype(jnp.float32)

    grid_spec = pltpu.PrefetchScalarGridSpec(
        num_scalar_prefetch=0,
        grid=(n_tiles, v_tiles),
        in_specs=[
            pl.BlockSpec((tile_n, H), lambda i, v: (i, 0)),    # x tile (bf16)
            pl.BlockSpec((tile_n, 1), lambda i, v: (i, 0)),    # labels tile
            pl.BlockSpec((H, H), lambda i, v: (0, 0),
                         pipeline_mode=pl.Buffered(1)),        # W1 (invariant)
            pl.BlockSpec((1, H), lambda i, v: (0, 0),
                         pipeline_mode=pl.Buffered(1)),        # b1 (invariant)
            pl.BlockSpec((H, tv), lambda i, v: (0, v)),        # Wv vocab tile
            pl.BlockSpec((1, tv), lambda i, v: (0, v)),        # bv vocab tile
        ],
        out_specs=(
            pl.BlockSpec((tile_n, H), lambda i, v: (i, 0)),        # hidden
            pl.BlockSpec((tile_n, tv), lambda i, v: (i, v)),       # logits
            pl.BlockSpec((1, 1, _LANE), lambda i, v: (i, 0, 0)),   # tile loss
        ),
        scratch_shapes=[
            pltpu.VMEM((tile_n, H), jnp.bfloat16),   # cached hidden tile
            pltpu.VMEM((tile_n, 1), jnp.float32),    # running max
            pltpu.VMEM((tile_n, 1), jnp.float32),    # running sum-exp
            pltpu.VMEM((tile_n, 1), jnp.float32),    # label logit
        ],
    )
    cost = pl.CostEstimate(
        flops=2 * n_pad * H * H + 2 * n_pad * H * V,
        transcendentals=n_pad * (H + V),             # gelu + exp
        bytes_accessed=(2 * n_pad * H                # x (bf16)
                        + 2 * (H * H + H * V)        # bf16 weights
                        + 4 * (H + V)                # f32 biases
                        + 4 * n_pad                  # labels
                        + 2 * n_pad * H              # hidden out (bf16)
                        + 2 * n_pad * V              # logits out (bf16)
                        + 4 * n_tiles * _LANE),      # per-tile loss sums
    )
    h, logits, tileloss = pl.pallas_call(
        _fused_base_ce_kernel,
        out_shape=(
            jax.ShapeDtypeStruct((n_pad, H), jnp.bfloat16),
            jax.ShapeDtypeStruct((n_pad, V), jnp.bfloat16),
            jax.ShapeDtypeStruct((n_tiles, 1, _LANE), jnp.float32),
        ),
        grid_spec=grid_spec,
        compiler_params=pltpu.CompilerParams(
            dimension_semantics=("parallel", "arbitrary"),
            vmem_limit_bytes=_vmem_limit_bytes()),
        cost_estimate=cost,
    )(x2d, labels2d, w1_bf, b1_2d, wv_bf, bv_2d)

    loss_sum = jnp.sum(tileloss[:, 0, 0])
    n_valid = jnp.maximum(jnp.sum((labels >= 0).astype(jnp.float32)), 1.0)
    return h[:N], logits[:N], loss_sum / n_valid


# ----------------------------------------------------------------------------
# MemoryCell forward (mirrors the PyTorch module)
# ----------------------------------------------------------------------------
def memory_cell_forward(params, input_ids, *, num_mem_tokens,
                        tile_n=256, tile_v=512):
    B, L = input_ids.shape
    H = params["Wd"].shape[1]          # dense_dim == base-model hidden size
    V = params["Wv"].shape[1]
    M = num_mem_tokens

    # --- set_memory: tiny (M, memory_dim) Linear computed ONCE (the PyTorch
    # `memory.repeat(B,1,1)` before the Linear is redundant), broadcast over B.
    # Folded into plain jnp so XLA fuses it with the embedding/concat glue.
    mem_dense = params["memory"] @ params["Wd"] + params["bd"]
    memory_state = jnp.broadcast_to(mem_dense[None], (B, M, H))

    # --- process_input: embedding lookup + concat (plain-JAX glue) ----------
    inputs_embeds = jnp.take(params["emb"], input_ids, axis=0)        # (B,L,H)
    x = jnp.concatenate([memory_state, inputs_embeds], axis=1)        # (B,M+L,H)
    x2d = x.reshape(B * (M + L), H)

    # --- shifted labels aligned to the flattened (B*(M+L)) token stream -----
    # position t predicts input_ids[:, t-M+1] for M <= t <= M+L-2; memory
    # positions and the last token of each sequence get -1 (ignored).
    neg_m = jnp.full((B, M), -1, jnp.int32)
    neg_1 = jnp.full((B, 1), -1, jnp.int32)
    labels = jnp.concatenate(
        [neg_m, input_ids[:, 1:].astype(jnp.int32), neg_1], axis=1
    ).reshape(B * (M + L))

    # --- fused base model + shifted CE (single Pallas pipeline) -------------
    hf, logitsf, loss = base_model_with_loss(
        x2d, labels, params["W1"], params["b1"], params["Wv"], params["bv"],
        tile_n=tile_n, tile_v=tile_v)
    hidden = hf.reshape(B, M + L, H)
    logits = logitsf.reshape(B, M + L, V)

    # --- process_output: strip memory positions -----------------------------
    new_memory_state = hidden[:, M:]                                   # (B,L,H)
    out_logits = logits[:, M:]                                         # (B,L,V)
    return out_logits, loss, new_memory_state


# ----------------------------------------------------------------------------
# Pure-JAX reference (same bf16 matmul recipe) for a light correctness check
# ----------------------------------------------------------------------------
def reference_forward(params, input_ids, num_mem_tokens):
    B, L = input_ids.shape
    M = num_mem_tokens
    H = params["Wd"].shape[1]
    V = params["Wv"].shape[1]
    mem = params["memory"] @ params["Wd"] + params["bd"]
    memory_state = jnp.broadcast_to(mem[None], (B, M, H))
    emb = jnp.take(params["emb"], input_ids, axis=0)
    x = jnp.concatenate([memory_state, emb], axis=1).reshape(B * (M + L), H)
    h = jnp.dot(x.astype(jnp.bfloat16), params["W1"].astype(jnp.bfloat16),
                preferred_element_type=jnp.float32) + params["b1"]
    h = jax.nn.gelu(h, approximate=True)
    logits = jnp.dot(h.astype(jnp.bfloat16), params["Wv"].astype(jnp.bfloat16),
                     preferred_element_type=jnp.float32) + params["bv"]
    hidden = h.reshape(B, M + L, H)
    logits = logits.reshape(B, M + L, V)
    out_logits = logits[:, M:]
    shift_logits = out_logits[:, :-1].reshape(B * (L - 1), V)
    labels = input_ids[:, 1:].reshape(-1)
    lse = jax.nn.logsumexp(shift_logits, axis=-1)
    ll = jnp.take_along_axis(shift_logits, labels[:, None], axis=-1)[:, 0]
    loss = jnp.mean(lse - ll)
    return out_logits, loss, hidden[:, M:]


# ----------------------------------------------------------------------------
# Deterministic parameter init + run
# ----------------------------------------------------------------------------
def init_params(key, vocab, hidden, memory_dim, dense_dim, num_mem_tokens):
    k = jax.random.split(key, 7)
    emb = jax.random.normal(k[0], (vocab, hidden), jnp.float32) * 0.02
    emb_std = jnp.std(emb)
    # memory = randn(M, memory_dim) * embeddings.weight.std()
    memory = (jax.random.normal(k[1], (num_mem_tokens, memory_dim), jnp.float32)
              * emb_std)
    # memory_density: Linear(memory_dim, dense_dim)
    Wd = (jax.random.normal(k[2], (memory_dim, dense_dim), jnp.float32)
          / jnp.sqrt(memory_dim * 1.0))
    bd = jax.random.normal(k[3], (dense_dim,), jnp.float32) * 0.01
    # frozen synthetic base-model weights
    W1 = (jax.random.normal(k[4], (hidden, hidden), jnp.float32)
          / jnp.sqrt(hidden * 1.0))
    b1 = jnp.zeros((hidden,), jnp.float32)
    Wv = (jax.random.normal(k[5], (hidden, vocab), jnp.float32)
          / jnp.sqrt(hidden * 1.0))
    bv = jnp.zeros((vocab,), jnp.float32)
    return dict(emb=emb, memory=memory, Wd=Wd, bd=bd, W1=W1, b1=b1, Wv=Wv, bv=bv)


if __name__ == "__main__":
    B, L = 2, 8                 # batch, input sequence length
    num_mem_tokens = 4
    memory_dim = 128            # multiples of 128 -> lane-dense blocks
    dense_dim = memory_dim      # dense_dim=None -> memory_dim (== hidden)
    hidden = dense_dim          # synthetic base-model hidden size
    vocab = 256

    key = jax.random.PRNGKey(0)
    pkey, dkey = jax.random.split(key)
    params = init_params(pkey, vocab, hidden, memory_dim, dense_dim,
                         num_mem_tokens)
    input_ids = jax.random.randint(dkey, (B, L), 0, vocab, dtype=jnp.int32)

    # tile_n=8 / tile_v=128 exercise a multi-step 2D grid at these toy shapes;
    # at real sizes use tile_n >= 256 and tile_v a multiple of 256 (v6e/v7x MXU).
    fwd = jax.jit(functools.partial(memory_cell_forward,
                                    num_mem_tokens=num_mem_tokens,
                                    tile_n=8, tile_v=128))
    out_logits, loss, new_memory_state = fwd(params, input_ids)
    jax.block_until_ready((out_logits, loss, new_memory_state))

    assert out_logits.shape == (B, L, vocab)
    assert new_memory_state.shape == (B, L, hidden)
    assert loss.shape == () and bool(jnp.isfinite(loss))

    # Light numerical check against a pure-JAX reference (same bf16 recipe;
    # kernel outputs are bf16 so compare with tolerance).
    ref_logits, ref_loss, ref_mem = reference_forward(params, input_ids,
                                                      num_mem_tokens)
    assert jnp.allclose(out_logits.astype(jnp.float32), ref_logits,
                        atol=5e-3, rtol=5e-2)
    assert jnp.allclose(new_memory_state.astype(jnp.float32), ref_mem,
                        atol=5e-3, rtol=5e-2)
    assert jnp.allclose(loss, ref_loss, atol=5e-3, rtol=5e-2)

    print("KERNEL_OK")
</pallas_src>

<mosaic_0001>
module attributes {stable_mosaic.version = 11 : i64} {
  func.func @_fused_base_ce_kernel(%arg0: i32, %arg1: i32, %arg2: memref<8x128xbf16, #tpu.memory_space<vmem>>, %arg3: memref<8x1xi32, #tpu.memory_space<vmem>>, %arg4: memref<128x128xbf16, #tpu.memory_space<vmem>>, %arg5: memref<1x128xf32, #tpu.memory_space<vmem>>, %arg6: memref<128x128xbf16, #tpu.memory_space<vmem>>, %arg7: memref<1x128xf32, #tpu.memory_space<vmem>>, %arg8: memref<8x128xbf16, #tpu.memory_space<vmem>>, %arg9: memref<8x128xbf16, #tpu.memory_space<vmem>>, %arg10: memref<1x1x128xf32, #tpu.memory_space<vmem>>, %arg11: memref<8x128xbf16, #tpu.memory_space<vmem>>, %arg12: memref<8x1xf32, #tpu.memory_space<vmem>>, %arg13: memref<8x1xf32, #tpu.memory_space<vmem>>, %arg14: memref<8x1xf32, #tpu.memory_space<vmem>>) attributes {dimension_semantics = [#tpu.dimension_semantics<parallel>, #tpu.dimension_semantics<arbitrary>], iteration_bounds = array<i64: 3, 2>, scalar_prefetch = 0 : i64, scratch_operands = 4 : i64, tpu.core_type = #tpu.core_type<tc>, window_params = [{transform_indices = @transform_0, window_bounds = array<i64: 8, 128>}, {transform_indices = @transform_1, window_bounds = array<i64: 8, 1>}, {pipeline_mode = #tpu.pipeline_mode<synchronous>, transform_indices = @transform_2, window_bounds = array<i64: 128, 128>}, {pipeline_mode = #tpu.pipeline_mode<synchronous>, transform_indices = @transform_3, window_bounds = array<i64: 1, 128>}, {transform_indices = @transform_4, window_bounds = array<i64: 128, 128>}, {transform_indices = @transform_5, window_bounds = array<i64: 1, 128>}, {transform_indices = @transform_6, window_bounds = array<i64: 8, 128>}, {transform_indices = @transform_7, window_bounds = array<i64: 8, 128>}, {transform_indices = @transform_8, window_bounds = array<i64: 1, 1, 128>}]} {
    %c0_i32 = arith.constant 0 : i32
    %0 = arith.cmpi eq, %arg1, %c0_i32 : i32
    %1 = arith.extui %0 : i1 to i32
    %c0_i32_0 = arith.constant 0 : i32
    %2 = arith.cmpi ne, %1, %c0_i32_0 : i32
    scf.if %2 {
      %c0_27 = arith.constant 0 : index
      %c0_28 = arith.constant 0 : index
      %44 = vector.load %arg2[%c0_27, %c0_28] : memref<8x128xbf16, #tpu.memory_space<vmem>>, vector<8x128xbf16>
      %c0_29 = arith.constant 0 : index
      %c0_30 = arith.constant 0 : index
      %45 = vector.load %arg4[%c0_29, %c0_30] : memref<128x128xbf16, #tpu.memory_space<vmem>>, vector<128x128xbf16>
      %cst_31 = arith.constant dense<0.000000e+00> : vector<8x128xf32>
      %46 = tpu.matmul %44, %45, %cst_31 {dimension_numbers = #tpu.dot_dimension_numbers<[1], [0], [0], [1], [0, 0, 1, 1], [], []>} : vector<8x128xbf16>, vector<128x128xbf16>, vector<8x128xf32> -> vector<8x128xf32>
      %c0_32 = arith.constant 0 : index
      %c0_33 = arith.constant 0 : index
      %47 = vector.load %arg5[%c0_32, %c0_33] : memref<1x128xf32, #tpu.memory_space<vmem>>, vector<1x128xf32>
      %48 = vector.broadcast %47 : vector<1x128xf32> to vector<8x128xf32>
      %49 = arith.addf %46, %48 : vector<8x128xf32>
      %50 = arith.mulf %49, %49 : vector<8x128xf32>
      %51 = arith.mulf %49, %50 : vector<8x128xf32>
      %cst_34 = arith.constant 4.471500e-02 : f32
      %52 = vector.broadcast %cst_34 : f32 to vector<8x128xf32>
      %53 = arith.mulf %52, %51 : vector<8x128xf32>
      %54 = arith.addf %49, %53 : vector<8x128xf32>
      %cst_35 = arith.constant 0.797884583 : f32
      %55 = vector.broadcast %cst_35 : f32 to vector<8x128xf32>
      %56 = arith.mulf %55, %54 : vector<8x128xf32>
      %57 = math.tanh %56 : vector<8x128xf32>
      %cst_36 = arith.constant 1.000000e+00 : f32
      %58 = vector.broadcast %cst_36 : f32 to vector<8x128xf32>
      %59 = arith.addf %58, %57 : vector<8x128xf32>
      %cst_37 = arith.constant 5.000000e-01 : f32
      %60 = vector.broadcast %cst_37 : f32 to vector<8x128xf32>
      %61 = arith.mulf %60, %59 : vector<8x128xf32>
      %62 = arith.mulf %49, %61 : vector<8x128xf32>
      %63 = arith.truncf %62 : vector<8x128xf32> to vector<8x128xbf16>
      %c0_38 = arith.constant 0 : index
      %c0_39 = arith.constant 0 : index
      %64 = vector.load %arg11[%c0_38, %c0_39] : memref<8x128xbf16, #tpu.memory_space<vmem>>, vector<8x128xbf16>
      tpu.vector_store %arg11[%c0_38, %c0_39], %63 {strides = array<i32>} : memref<8x128xbf16, #tpu.memory_space<vmem>>, vector<8x128xbf16>,
      %c0_40 = arith.constant 0 : index
      %c0_41 = arith.constant 0 : index
      %65 = vector.load %arg8[%c0_40, %c0_41] : memref<8x128xbf16, #tpu.memory_space<vmem>>, vector<8x128xbf16>
      tpu.vector_store %arg8[%c0_40, %c0_41], %63 {strides = array<i32>} : memref<8x128xbf16, #tpu.memory_space<vmem>>, vector<8x128xbf16>,
      %cst_42 = arith.constant 0xFF800000 : f32
      %66 = vector.broadcast %cst_42 : f32 to vector<8x1xf32>
      %c0_43 = arith.constant 0 : index
      %c0_44 = arith.constant 0 : index
      %67 = vector.load %arg12[%c0_43, %c0_44] : memref<8x1xf32, #tpu.memory_space<vmem>>, vector<8x1xf32>
      tpu.vector_store %arg12[%c0_43, %c0_44], %66 {strides = array<i32>} : memref<8x1xf32, #tpu.memory_space<vmem>>, vector<8x1xf32>,
      %cst_45 = arith.constant 0.000000e+00 : f32
      %68 = vector.broadcast %cst_45 : f32 to vector<8x1xf32>
      %c0_46 = arith.constant 0 : index
      %c0_47 = arith.constant 0 : index
      %69 = vector.load %arg13[%c0_46, %c0_47] : memref<8x1xf32, #tpu.memory_space<vmem>>, vector<8x1xf32>
      tpu.vector_store %arg13[%c0_46, %c0_47], %68 {strides = array<i32>} : memref<8x1xf32, #tpu.memory_space<vmem>>, vector<8x1xf32>,
      %cst_48 = arith.constant 0.000000e+00 : f32
      %70 = vector.broadcast %cst_48 : f32 to vector<8x1xf32>
      %c0_49 = arith.constant 0 : index
      %c0_50 = arith.constant 0 : index
      %71 = vector.load %arg14[%c0_49, %c0_50] : memref<8x1xf32, #tpu.memory_space<vmem>>, vector<8x1xf32>
      tpu.vector_store %arg14[%c0_49, %c0_50], %70 {strides = array<i32>} : memref<8x1xf32, #tpu.memory_space<vmem>>, vector<8x1xf32>,
    } else {
    }
    %c0 = arith.constant 0 : index
    %c0_1 = arith.constant 0 : index
    %3 = vector.load %arg11[%c0, %c0_1] : memref<8x128xbf16, #tpu.memory_space<vmem>>, vector<8x128xbf16>
    %c0_2 = arith.constant 0 : index
    %c0_3 = arith.constant 0 : index
    %4 = vector.load %arg6[%c0_2, %c0_3] : memref<128x128xbf16, #tpu.memory_space<vmem>>, vector<128x128xbf16>
    %cst = arith.constant dense<0.000000e+00> : vector<8x128xf32>
    %5 = tpu.matmul %3, %4, %cst {dimension_numbers = #tpu.dot_dimension_numbers<[1], [0], [0], [1], [0, 0, 1, 1], [], []>} : vector<8x128xbf16>, vector<128x128xbf16>, vector<8x128xf32> -> vector<8x128xf32>
    %c0_4 = arith.constant 0 : index
    %c0_5 = arith.constant 0 : index
    %6 = vector.load %arg7[%c0_4, %c0_5] : memref<1x128xf32, #tpu.memory_space<vmem>>, vector<1x128xf32>
    %7 = vector.broadcast %6 : vector<1x128xf32> to vector<8x128xf32>
    %8 = arith.addf %5, %7 : vector<8x128xf32>
    %9 = arith.truncf %8 : vector<8x128xf32> to vector<8x128xbf16>
    %c0_6 = arith.constant 0 : index
    %c0_7 = arith.constant 0 : index
    %10 = vector.load %arg9[%c0_6, %c0_7] : memref<8x128xbf16, #tpu.memory_space<vmem>>, vector<8x128xbf16>
    tpu.vector_store %arg9[%c0_6, %c0_7], %9 {strides = array<i32>} : memref<8x128xbf16, #tpu.memory_space<vmem>>, vector<8x128xbf16>,
    %c0_8 = arith.constant 0 : index
    %c0_9 = arith.constant 0 : index
    %11 = vector.load %arg3[%c0_8, %c0_9] : memref<8x1xi32, #tpu.memory_space<vmem>>, vector<8x1xi32>
    %c0_10 = arith.constant 0 : index
    %c0_11 = arith.constant 0 : index
    %12 = vector.load %arg12[%c0_10, %c0_11] : memref<8x1xf32, #tpu.memory_space<vmem>>, vector<8x1xf32>
    %cst_12 = arith.constant dense<0xFF800000> : vector<8xf32>
    %13 = vector.multi_reduction <maximumf>, %8, %cst_12 [1] : vector<8x128xf32> to vector<8xf32>
    %14 = vector.shape_cast %13 : vector<8xf32> to vector<8x1xf32>
    %15 = arith.maximumf %12, %14 : vector<8x1xf32>
    %16 = arith.subf %12, %15 : vector<8x1xf32>
    %17 = math.exp %16 : vector<8x1xf32>
    %c0_13 = arith.constant 0 : index
    %c0_14 = arith.constant 0 : index
    %18 = vector.load %arg13[%c0_13, %c0_14] : memref<8x1xf32, #tpu.memory_space<vmem>>, vector<8x1xf32>
    %19 = arith.mulf %17, %18 : vector<8x1xf32>
    %20 = vector.broadcast %15 : vector<8x1xf32> to vector<8x128xf32>
    %21 = arith.subf %8, %20 : vector<8x128xf32>
    %22 = math.exp %21 : vector<8x128xf32>
    %cst_15 = arith.constant dense<0.000000e+00> : vector<8xf32>
    %23 = vector.multi_reduction <add>, %22, %cst_15 [1] : vector<8x128xf32> to vector<8xf32>
    %24 = vector.shape_cast %23 : vector<8xf32> to vector<8x1xf32>
    %25 = arith.addf %19, %24 : vector<8x1xf32>
    %c0_16 = arith.constant 0 : index
    %c0_17 = arith.constant 0 : index
    %26 = vector.load %arg13[%c0_16, %c0_17] : memref<8x1xf32, #tpu.memory_space<vmem>>, vector<8x1xf32>
    tpu.vector_store %arg13[%c0_16, %c0_17], %25 {strides = array<i32>} : memref<8x1xf32, #tpu.memory_space<vmem>>, vector<8x1xf32>,
    %27 = tpu.iota {dimensions = array<i32: 1>} : vector<8x128xi32>
    %c128_i32 = arith.constant 128 : i32
    %28 = arith.muli %arg1, %c128_i32 : i32
    %29 = vector.broadcast %28 : i32 to vector<8x128xi32>
    %30 = arith.addi %27, %29 : vector<8x128xi32>
    %c0_18 = arith.constant 0 : index
    %c0_19 = arith.constant 0 : index
    %31 = vector.load %arg14[%c0_18, %c0_19] : memref<8x1xf32, #tpu.memory_space<vmem>>, vector<8x1xf32>
    %32 = vector.broadcast %11 : vector<8x1xi32> to vector<8x128xi32>
    %33 = arith.cmpi eq, %30, %32 : vector<8x128xi32>
    %cst_20 = arith.constant 0.000000e+00 : f32
    %34 = vector.broadcast %cst_20 : f32 to vector<8x128xf32>
    %35 = arith.select %33, %8, %34 : vector<8x128xi1>, vector<8x128xf32>
    %cst_21 = arith.constant dense<0.000000e+00> : vector<8xf32>
    %36 = vector.multi_reduction <add>, %35, %cst_21 [1] : vector<8x128xf32> to vector<8xf32>
    %37 = vector.shape_cast %36 : vector<8xf32> to vector<8x1xf32>
    %38 = arith.addf %31, %37 : vector<8x1xf32>
    %c0_22 = arith.constant 0 : index
    %c0_23 = arith.constant 0 : index
    %39 = vector.load %arg14[%c0_22, %c0_23] : memref<8x1xf32, #tpu.memory_space<vmem>>, vector<8x1xf32>
    tpu.vector_store %arg14[%c0_22, %c0_23], %38 {strides = array<i32>} : memref<8x1xf32, #tpu.memory_space<vmem>>, vector<8x1xf32>,
    %c0_24 = arith.constant 0 : index
    %c0_25 = arith.constant 0 : index
    %40 = vector.load %arg12[%c0_24, %c0_25] : memref<8x1xf32, #tpu.memory_space<vmem>>, vector<8x1xf32>
    tpu.vector_store %arg12[%c0_24, %c0_25], %15 {strides = array<i32>} : memref<8x1xf32, #tpu.memory_space<vmem>>, vector<8x1xf32>,
    %c1_i32 = arith.constant 1 : i32
    %41 = arith.cmpi eq, %arg1, %c1_i32 : i32
    %42 = arith.extui %41 : i1 to i32
    %c0_i32_26 = arith.constant 0 : i32
    %43 = arith.cmpi ne, %42, %c0_i32_26 : i32
    scf.if %43 {
      %c0_i32_27 = arith.constant 0 : i32
      %44 = vector.broadcast %c0_i32_27 : i32 to vector<8x1xi32>
      %45 = arith.cmpi sge, %11, %44 : vector<8x1xi32>
      %c0_28 = arith.constant 0 : index
      %c0_29 = arith.constant 0 : index
      %46 = vector.load %arg12[%c0_28, %c0_29] : memref<8x1xf32, #tpu.memory_space<vmem>>, vector<8x1xf32>
      %c0_30 = arith.constant 0 : index
      %c0_31 = arith.constant 0 : index
      %47 = vector.load %arg13[%c0_30, %c0_31] : memref<8x1xf32, #tpu.memory_space<vmem>>, vector<8x1xf32>
      %48 = math.log %47 : vector<8x1xf32>
      %49 = arith.addf %46, %48 : vector<8x1xf32>
      %c0_32 = arith.constant 0 : index
      %c0_33 = arith.constant 0 : index
      %50 = vector.load %arg14[%c0_32, %c0_33] : memref<8x1xf32, #tpu.memory_space<vmem>>, vector<8x1xf32>
      %51 = arith.subf %49, %50 : vector<8x1xf32>
      %cst_34 = arith.constant 0.000000e+00 : f32
      %52 = vector.broadcast %cst_34 : f32 to vector<8x1xf32>
      %53 = arith.select %45, %51, %52 : vector<8x1xi1>, vector<8x1xf32>
      %54 = vector.shape_cast %53 : vector<8x1xf32> to vector<1x8x1xf32>
      %cst_35 = arith.constant dense<0.000000e+00> : vector<1xf32>
      %55 = vector.multi_reduction <add>, %54, %cst_35 [1, 2] : vector<1x8x1xf32> to vector<1xf32>
      %56 = vector.shape_cast %55 : vector<1xf32> to vector<1x1x1xf32>
      %57 = vector.extract %56[0, 0, 0] : f32 from vector<1x1x1xf32>
      %58 = vector.broadcast %57 : f32 to vector<1x1x128xf32>
      %c0_36 = arith.constant 0 : index
      %c0_37 = arith.constant 0 : index
      %c0_38 = arith.constant 0 : index
      %59 = vector.load %arg10[%c0_36, %c0_37, %c0_38] : memref<1x1x128xf32, #tpu.memory_space<vmem>>, vector<1x1x128xf32>
      tpu.vector_store %arg10[%c0_36, %c0_37, %c0_38], %58 {strides = array<i32>} : memref<1x1x128xf32, #tpu.memory_space<vmem>>, vector<1x1x128xf32>,
    } else {
    }
    return
  }
  func.func @transform_0(%arg0: i32, %arg1: i32) -> (i32, i32) {
    %c0_i32 = arith.constant 0 : i32
    %c0_i32_0 = arith.constant 0 : i32
    return %arg0, %c0_i32 : i32, i32
  }
  func.func @transform_1(%arg0: i32, %arg1: i32) -> (i32, i32) {
    %c0_i32 = arith.constant 0 : i32
    %c0_i32_0 = arith.constant 0 : i32
    return %arg0, %c0_i32 : i32, i32
  }
  func.func @transform_2(%arg0: i32, %arg1: i32) -> (i32, i32) {
    %c0_i32 = arith.constant 0 : i32
    %c0_i32_0 = arith.constant 0 : i32
    %c0_i32_1 = arith.constant 0 : i32
    return %c0_i32, %c0_i32_0 : i32, i32
  }
  func.func @transform_3(%arg0: i32, %arg1: i32) -> (i32, i32) {
    %c0_i32 = arith.constant 0 : i32
    %c0_i32_0 = arith.constant 0 : i32
    %c0_i32_1 = arith.constant 0 : i32
    return %c0_i32, %c0_i32_0 : i32, i32
  }
  func.func @transform_4(%arg0: i32, %arg1: i32) -> (i32, i32) {
    %c0_i32 = arith.constant 0 : i32
    %c0_i32_0 = arith.constant 0 : i32
    return %c0_i32, %arg1 : i32, i32
  }
  func.func @transform_5(%arg0: i32, %arg1: i32) -> (i32, i32) {
    %c0_i32 = arith.constant 0 : i32
    %c0_i32_0 = arith.constant 0 : i32
    return %c0_i32, %arg1 : i32, i32
  }
  func.func @transform_6(%arg0: i32, %arg1: i32) -> (i32, i32) {
    %c0_i32 = arith.constant 0 : i32
    %c0_i32_0 = arith.constant 0 : i32
    return %arg0, %c0_i32 : i32, i32
  }
  func.func @transform_7(%arg0: i32, %arg1: i32) -> (i32, i32) {
    %c0_i32 = arith.constant 0 : i32
    return %arg0, %arg1 : i32, i32
  }
  func.func @transform_8(%arg0: i32, %arg1: i32) -> (i32, i32, i32) {
    %c0_i32 = arith.constant 0 : i32
    %c0_i32_0 = arith.constant 0 : i32
    %c0_i32_1 = arith.constant 0 : i32
    return %arg0, %c0_i32, %c0_i32_0 : i32, i32, i32
  }
}

</mosaic_0001>

<llo_original>
// kernel: memory_cell_forward.1
$region0: #{memory_cell_forward.1}
  #allocation0 [shape = 'u32[]', space=smem, size = 0x4, offset = 0x4, fixed_abs, tag = 'smem constant byte address 0x4 - core index']
  #allocation1 [shape = 'u32[144,128]{1,0:T(1,128)}', space=vmem, size = 0x12000, scoped, tag = 'internal scratch']
  #allocation2 [shape = 'bf16[8,128]{1,0:T(8,128)(2,1)}', space=vmem, size = 0x800, scoped, tag = 'scratch operand']
  #allocation3 [shape = 'f32[8,1]{1,0:T(8,128)}', space=vmem, size = 0x1000, scoped, tag = 'scratch operand']
  #allocation4 [shape = 'f32[8,1]{1,0:T(8,128)}', space=vmem, size = 0x1000, scoped, tag = 'scratch operand']
  #allocation5 [shape = 'f32[8,1]{1,0:T(8,128)}', space=vmem, size = 0x1000, scoped, tag = 'scratch operand']
  %s0 = inlined_call_operand.vmem [shape: bf16[24,128], index: 0, kind: input, shape index: {}]
  %s1 = inlined_call_operand.vmem [shape: s32[24,1], index: 1, kind: input, shape index: {}]
  %s2 = inlined_call_operand.vmem [shape: bf16[128,128], index: 2, kind: input, shape index: {}]
  %s3 = inlined_call_operand.vmem [shape: f32[1,128], index: 3, kind: input, shape index: {}]
  %s4 = inlined_call_operand.vmem [shape: bf16[128,256], index: 4, kind: input, shape index: {}]
  %s5 = inlined_call_operand.vmem [shape: f32[1,256], index: 5, kind: input, shape index: {}]
  %s6 = inlined_call_operand.vmem [shape: bf16[24,128], index: 6, kind: output, shape index: {0}]
  %s7 = inlined_call_operand.vmem [shape: bf16[24,256], index: 7, kind: output, shape index: {1}]
  %s8 = inlined_call_operand.vmem [shape: f32[3,1,128], index: 8, kind: output, shape index: {2}]
  %9 = xla_tuple %s6, %s7, %s8
  %s10 = sld [smem:[#allocation0]]
  $region122: #{memory_cell_forward.1} parent=0
    _
  %s12 = ssub.s32 1, %s10
  %s13 = scalar_select 0, %s12, %s10
  $region1: #{memory_cell_forward.1} parent=0
    #allocation6 [shape = 'u8[65536]{0}', space=vmem, size = 0x10000, scoped, tag = 'input window, operand 4']
    loop: start=0, step=1, limit=8
    $region2: #{memory_cell_forward.1} parent=1 // loop_pre_header
      _
    $region3: #{memory_cell_forward.1} parent=1 // loop_header
      %s15 = sphi 0, %s19
      %p16 = scmp.ge.s32.totalorder %s15, 8
      %s22 = sphi 0, %s34
      %s23 = sphi 0, %s30
      %s24 = sphi 0, %s22
      %s25 = sphi 0, %s23
      %s26 = sphi 0, %s24
      %s27 = sphi 0, %s25
      %s37 = sphi 0, %s39
      %s40 = sphi 0, %s37
      %s41 = sphi 0, %s40
      %s57 = sphi 0, %s41
      %s63 = sphi 0, %s65
      %s66 = sphi 0, %s63
      %s67 = sphi 0, %s66
      %s83 = sphi 0, %s67
      %s87 = sphi 0, %s87
      %s89 = sphi 0, %s87
      %s90 = sphi 0, %s89
      %s104 = sphi 0, %s90
      %s108 = sphi 0, %s108
      %s110 = sphi 0, %s108
      %s111 = sphi 0, %s110
      %s125 = sphi 0, %s111
      %s131 = sphi 0, %s133
      %s134 = sphi 0, %s131
      %s135 = sphi 0, %s134
      %s151 = sphi 0, %s135
      %s157 = sphi 0, %s159
      %s160 = sphi 0, %s157
      %s161 = sphi 0, %s160
      %s177 = sphi 0, %s161
      %s183 = sphi 0, %s185
      %s186 = sphi 0, %s183
      %s187 = sphi 0, %s186
      %s203 = sphi 0, %s187
      %s211 = sphi 0, %s213
      %s214 = sphi 0, %s211
      %s215 = sphi 0, %s214
      %s231 = sphi 0, %s215
      %s237 = sphi 0, %s239
      %s240 = sphi 0, %s237
      %s241 = sphi 0, %s240
      %s257 = sphi 0, %s241
    $region4: #{memory_cell_forward.1} parent=1 // loop_header_branch
      %18 = sbr.rel (%p16) target = $region8
    $region5: #{memory_cell_forward.1} parent=1 // loop_body
      %s20 = ssub.s32 %s15, 1
      %s21 = ssub.s32 %s15, 2
      %s28 = sadd.s32 1, %s23
      %p29 = scmp.ge.s32.totalorder %s28, 2
      %s30 = scalar_select %p29, 0, %s28
      %s31 = sadd.s32 1, %s22
      %s32 = scalar_select %p29, %s31, %s22
      %p33 = scmp.ge.s32.totalorder %s32, 3
      %s34 = scalar_select %p33, 0, %s32
      %s35 = ssub.s32 %s22, %s34
      %p36 = scmp.eq.s32.totalorder %s35, 0
      %s38 = sadd.s32 %s37, 1
      %s39 = scalar_select %p36, %s37, %s38
      %p42 = pneg %p36
      %p43 = scmp.eq.s32.totalorder %s15, 5
      %p44 = por %p42, %p43
      %p45 = scmp.ne.s32.totalorder %s37, %s40
      %p46 = scmp.eq.s32.totalorder %s15, 0
      %p47 = por %p45, %p46
      %p48 = scmp.ne.s32.totalorder %s37, %s40
      %p49 = scmp.eq.s32.totalorder %s20, 5
      %p50 = por %p48, %p49
      %p51 = scmp.ne.s32.totalorder %s40, %s41
      %p52 = scmp.eq.s32.totalorder %s20, 0
      %p53 = por %p51, %p52
      %p54 = scmp.ne.s32.totalorder %s40, %s41
      %p55 = scmp.eq.s32.totalorder %s21, 5
      %p56 = por %p54, %p55
      %p58 = scmp.ne.s32.totalorder %s41, %s57
      %p59 = scmp.eq.s32.totalorder %s21, 0
      %p60 = por %p58, %p59
      %s61 = ssub.s32 %s22, %s34
      %p62 = scmp.eq.s32.totalorder %s61, 0
      %s64 = sadd.s32 %s63, 1
      %s65 = scalar_select %p62, %s63, %s64
      %p68 = pneg %p62
      %p69 = scmp.eq.s32.totalorder %s15, 5
      %p70 = por %p68, %p69
      %p71 = scmp.ne.s32.totalorder %s63, %s66
      %p72 = scmp.eq.s32.totalorder %s15, 0
      %p73 = por %p71, %p72
      %p74 = scmp.ne.s32.totalorder %s63, %s66
      %p75 = scmp.eq.s32.totalorder %s20, 5
      %p76 = por %p74, %p75
      %p77 = scmp.ne.s32.totalorder %s66, %s67
      %p78 = scmp.eq.s32.totalorder %s20, 0
      %p79 = por %p77, %p78
      %p80 = scmp.ne.s32.totalorder %s66, %s67
      %p81 = scmp.eq.s32.totalorder %s21, 5
      %p82 = por %p80, %p81
      %p84 = scmp.ne.s32.totalorder %s67, %s83
      %p85 = scmp.eq.s32.totalorder %s21, 0
      %p86 = por %p84, %p85
      %s88 = sadd.s32 %s87, 1
      %p91 = scmp.eq.s32.totalorder %s15, 5
      %p92 = scmp.ne.s32.totalorder %s87, %s89
      %p93 = scmp.eq.s32.totalorder %s15, 0
      %p94 = por %p92, %p93
      %p95 = scmp.ne.s32.totalorder %s87, %s89
      %p96 = scmp.eq.s32.totalorder %s20, 5
      %p97 = por %p95, %p96
      %p98 = scmp.ne.s32.totalorder %s89, %s90
      %p99 = scmp.eq.s32.totalorder %s20, 0
      %p100 = por %p98, %p99
      %p101 = scmp.ne.s32.totalorder %s89, %s90
      %p102 = scmp.eq.s32.totalorder %s21, 5
      %p103 = por %p101, %p102
      %p105 = scmp.ne.s32.totalorder %s90, %s104
      %p106 = scmp.eq.s32.totalorder %s21, 0
      %p107 = por %p105, %p106
      %s109 = sadd.s32 %s108, 1
      %p112 = scmp.eq.s32.totalorder %s15, 5
      %p113 = scmp.ne.s32.totalorder %s108, %s110
      %p114 = scmp.eq.s32.totalorder %s15, 0
      %p115 = por %p113, %p114
      %p116 = scmp.ne.s32.totalorder %s108, %s110
      %p117 = scmp.eq.s32.totalorder %s20, 5
      %p118 = por %p116, %p117
      %p119 = scmp.ne.s32.totalorder %s110, %s111
      %p120 = scmp.eq.s32.totalorder %s20, 0
      %p121 = por %p119, %p120
      %p122 = scmp.ne.s32.totalorder %s110, %s111
      %p123 = scmp.eq.s32.totalorder %s21, 5
      %p124 = por %p122, %p123
      %p126 = scmp.ne.s32.totalorder %s111, %s125
      %p127 = scmp.eq.s32.totalorder %s21, 0
      %p128 = por %p126, %p127
      %s129 = ssub.s32 %s23, %s30
      %p130 = scmp.eq.s32.totalorder %s129, 0
      %s132 = sadd.s32 %s131, 1
      %s133 = scalar_select %p130, %s131, %s132
      %p136 = pneg %p130
      %p137 = scmp.eq.s32.totalorder %s15, 5
      %p138 = por %p136, %p137
      %p139 = scmp.ne.s32.totalorder %s131, %s134
      %p140 = scmp.eq.s32.totalorder %s15, 0
      %p141 = por %p139, %p140
      %p142 = scmp.ne.s32.totalorder %s131, %s134
      %p143 = scmp.eq.s32.totalorder %s20, 5
      %p144 = por %p142, %p143
      %p145 = scmp.ne.s32.totalorder %s134, %s135
      %p146 = scmp.eq.s32.totalorder %s20, 0
      %p147 = por %p145, %p146
      %p148 = scmp.ne.s32.totalorder %s134, %s135
      %p149 = scmp.eq.s32.totalorder %s21, 5
      %p150 = por %p148, %p149
      %p152 = scmp.ne.s32.totalorder %s135, %s151
      %p153 = scmp.eq.s32.totalorder %s21, 0
      %p154 = por %p152, %p153
      %s155 = ssub.s32 %s23, %s30
      %p156 = scmp.eq.s32.totalorder %s155, 0
      %s158 = sadd.s32 %s157, 1
      %s159 = scalar_select %p156, %s157, %s158
      %p162 = pneg %p156
      %p163 = scmp.eq.s32.totalorder %s15, 5
      %p164 = por %p162, %p163
      %p165 = scmp.ne.s32.totalorder %s157, %s160
      %p166 = scmp.eq.s32.totalorder %s15, 0
      %p167 = por %p165, %p166
      %p168 = scmp.ne.s32.totalorder %s157, %s160
      %p169 = scmp.eq.s32.totalorder %s20, 5
      %p170 = por %p168, %p169
      %p171 = scmp.ne.s32.totalorder %s160, %s161
      %p172 = scmp.eq.s32.totalorder %s20, 0
      %p173 = por %p171, %p172
      %p174 = scmp.ne.s32.totalorder %s160, %s161
      %p175 = scmp.eq.s32.totalorder %s21, 5
      %p176 = por %p174, %p175
      %p178 = scmp.ne.s32.totalorder %s161, %s177
      %p179 = scmp.eq.s32.totalorder %s21, 0
      %p180 = por %p178, %p179
      %s181 = ssub.s32 %s22, %s34
      %p182 = scmp.eq.s32.totalorder %s181, 0
      %s184 = sadd.s32 %s183, 1
      %s185 = scalar_select %p182, %s183, %s184
      %p188 = pneg %p182
      %p189 = scmp.eq.s32.totalorder %s15, 5
      %p190 = por %p188, %p189
      %p191 = scmp.ne.s32.totalorder %s183, %s186
      %p192 = scmp.eq.s32.totalorder %s15, 0
      %p193 = por %p191, %p192
      %p194 = scmp.ne.s32.totalorder %s183, %s186
      %p195 = scmp.eq.s32.totalorder %s20, 5
      %p196 = por %p194, %p195
      %p197 = scmp.ne.s32.totalorder %s186, %s187
      %p198 = scmp.eq.s32.totalorder %s20, 0
      %p199 = por %p197, %p198
      %p200 = scmp.ne.s32.totalorder %s186, %s187
      %p201 = scmp.eq.s32.totalorder %s21, 5
      %p202 = por %p200, %p201
      %p204 = scmp.ne.s32.totalorder %s187, %s203
      %p205 = scmp.eq.s32.totalorder %s21, 0
      %p206 = por %p204, %p205
      %s207 = ssub.s32 %s22, %s34
      %s208 = ssub.s32 %s23, %s30
      %s209 = sor.u32 %s207, %s208
      %p210 = scmp.eq.s32.totalorder %s209, 0
      %s212 = sadd.s32 %s211, 1
      %s213 = scalar_select %p210, %s211, %s212
      %p216 = pneg %p210
      %p217 = scmp.eq.s32.totalorder %s15, 5
      %p218 = por %p216, %p217
      %p219 = scmp.ne.s32.totalorder %s211, %s214
      %p220 = scmp.eq.s32.totalorder %s15, 0
      %p221 = por %p219, %p220
      %p222 = scmp.ne.s32.totalorder %s211, %s214
      %p223 = scmp.eq.s32.totalorder %s20, 5
      %p224 = por %p222, %p223
      %p225 = scmp.ne.s32.totalorder %s214, %s215
      %p226 = scmp.eq.s32.totalorder %s20, 0
      %p227 = por %p225, %p226
      %p228 = scmp.ne.s32.totalorder %s214, %s215
      %p229 = scmp.eq.s32.totalorder %s21, 5
      %p230 = por %p228, %p229
      %p232 = scmp.ne.s32.totalorder %s215, %s231
      %p233 = scmp.eq.s32.totalorder %s21, 0
      %p234 = por %p232, %p233
      %s235 = ssub.s32 %s22, %s34
      %p236 = scmp.eq.s32.totalorder %s235, 0
      %s238 = sadd.s32 %s237, 1
      %s239 = scalar_select %p236, %s237, %s238
      %p242 = pneg %p236
      %p243 = scmp.eq.s32.totalorder %s15, 5
      %p244 = por %p242, %p243
      %p245 = scmp.ne.s32.totalorder %s237, %s240
      %p246 = scmp.eq.s32.totalorder %s15, 0
      %p247 = por %p245, %p246
      %p248 = scmp.ne.s32.totalorder %s237, %s240
      %p249 = scmp.eq.s32.totalorder %s20, 5
      %p250 = por %p248, %p249
      %p251 = scmp.ne.s32.totalorder %s240, %s241
      %p252 = scmp.eq.s32.totalorder %s20, 0
      %p253 = por %p251, %p252
      %p254 = scmp.ne.s32.totalorder %s240, %s241
      %p255 = scmp.eq.s32.totalorder %s21, 5
      %p256 = por %p254, %p255
      %p258 = scmp.ne.s32.totalorder %s241, %s257
      %p259 = scmp.eq.s32.totalorder %s21, 0
      %p260 = por %p258, %p259
      %p261 = scmp.le.s32.totalorder 1, %s15
      %p262 = scmp.lt.s32.totalorder %s15, 7
      %p263 = pnand %p261, %p262
      %p264 = pneg %p263
      // Predicated region
      $region9: #{memory_cell_forward.1} parent=5 // pred_check
        _
      $region10: #{memory_cell_forward.1} parent=5 // pred_check_branch
        %266 = sbr.rel (%p263) target = $region12
      $region11: #{memory_cell_forward.1} parent=5 // pred_region
        %s267 = ssub.s32 %s15, 1
        // Predicated region
        $region13: #{memory_cell_forward.1} parent=11 // pred_check
          %p268 = pneg %p100
        $region14: #{memory_cell_forward.1} parent=11 // pred_check_branch
          %270 = sbr.rel (%p268) target = $region16
        $region15: #{memory_cell_forward.1} parent=11 // pred_region
          _
        $region16: #{memory_cell_forward.1} parent=11 // pred_fallthru
          _
        // Predicated region
        $region17: #{memory_cell_forward.1} parent=11 // pred_check
          %p271 = pneg %p121
        $region18: #{memory_cell_forward.1} parent=11 // pred_check_branch
          %273 = sbr.rel (%p271) target = $region20
        $region19: #{memory_cell_forward.1} parent=11 // pred_region
          _
        $region20: #{memory_cell_forward.1} parent=11 // pred_fallthru
          _
      $region12: #{memory_cell_forward.1} parent=5 // pred_fallthru
        _
      %p274 = scmp.lt.s32.totalorder %s15, 6
      // Predicated region
      $region21: #{memory_cell_forward.1} parent=5 // pred_check
        %p275 = pneg %p274
      $region22: #{memory_cell_forward.1} parent=5 // pred_check_branch
        %277 = sbr.rel (%p275) target = $region24
      $region23: #{memory_cell_forward.1} parent=5 // pred_region
        // Predicated region
        $region25: #{memory_cell_forward.1} parent=23 // pred_check
          %p278 = pneg %p47
        $region26: #{memory_cell_forward.1} parent=23 // pred_check_branch
          %280 = sbr.rel (%p278) target = $region28
        $region27: #{memory_cell_forward.1} parent=23 // pred_region
          %p281 = scmp.lt.s32.totalorder %s22, 2
          %s282 = scalar_select %p281, %s22, 2
          %s283 = smul.addr %s282, 4
          %s284 = scalar_lea.vmem %s0, %s283
        $region28: #{memory_cell_forward.1} parent=23 // pred_fallthru
          _
        // Predicated region
        $region29: #{memory_cell_forward.1} parent=23 // pred_check
          %p285 = pneg %p73
        $region30: #{memory_cell_forward.1} parent=23 // pred_check_branch
          %287 = sbr.rel (%p285) target = $region32
        $region31: #{memory_cell_forward.1} parent=23 // pred_region
          %p288 = scmp.lt.s32.totalorder %s22, 2
          %s289 = scalar_select %p288, %s22, 2
          %s290 = smul.addr %s289, 8
          %s291 = scalar_lea.vmem %s1, %s290
        $region32: #{memory_cell_forward.1} parent=23 // pred_fallthru
          _
        // Predicated region
        $region33: #{memory_cell_forward.1} parent=23 // pred_check
          %p292 = pneg %p141
        $region34: #{memory_cell_forward.1} parent=23 // pred_check_branch
          %294 = sbr.rel (%p292) target = $region36
        $region35: #{memory_cell_forward.1} parent=23 // pred_region
          %s295 = sand.u32 %s131, 1
          %s296 = sand.u32 %s131, 1
          %s297 = smul.addr %s296, 64
          %s298 = scalar_lea.vmem [#allocation6], %s297
          %s299 = smul.addr %s23, 4
          %s300 = scalar_lea.vmem %s4, %s299
          // Predicated region
          $region37: #{memory_cell_forward.1} parent=35 // pred_check
            _
          $region38: #{memory_cell_forward.1} parent=35 // pred_check_branch
            %302 = sbr.rel (0) target = $region40
          $region39: #{memory_cell_forward.1} parent=35 // pred_region
            // Predicated region
            $region41: #{memory_cell_forward.1} parent=39 // pred_check
              _
            $region42: #{memory_cell_forward.1} parent=39 // pred_check_branch
              %304 = sbr.rel target = $region44
            $region43: #{memory_cell_forward.1} parent=39 // pred_region
              // Predicated region
              $region56: #{memory_cell_forward.1} parent=43 // pred_check
                _
              $region57: #{memory_cell_forward.1} parent=43 // pred_check_branch
                %350 = sbr.rel (0) target = $region59
              $region58: #{memory_cell_forward.1} parent=43 // pred_region
                loop: start=0, step=1, limit=1
                $region60: #{memory_cell_forward.1} parent=58 // loop_pre_header
                  _
                $region61: #{memory_cell_forward.1} parent=58 // loop_header
                  %s352 = sphi 0, %s356
                  %p353 = scmp.ge.s32.totalorder %s352, 1
                  %s357 = sphi %s300, %s300
                  %s358 = sphi %s298, %s298
                $region62: #{memory_cell_forward.1} parent=58 // loop_header_branch
                  %355 = sbr.rel (%p353) target = $region66
                $region63: #{memory_cell_forward.1} parent=58 // loop_body
                  _
                $region64: #{memory_cell_forward.1} parent=58 // loop_footer
                  %s356 = sadd.s32 1, %s352
                $region65: #{memory_cell_forward.1} parent=58 // loop_footer_branch
                  %351 = sbr.rel target = $region61
                $region66: #{memory_cell_forward.1} parent=58 // loop_exit
                  _
                %s360 = ssub.s32 16, 1
                loop: start=0, step=1, limit=1
                $region67: #{memory_cell_forward.1} parent=58 // loop_pre_header
                  _
                $region68: #{memory_cell_forward.1} parent=58 // loop_header
                  %s362 = sphi 0, %s366
                  %p363 = scmp.ge.s32.totalorder %s362, 1
                  %s367 = sphi %s300, %s300
                  %s368 = sphi %s298, %s298
                $region69: #{memory_cell_forward.1} parent=58 // loop_header_branch
                  %365 = sbr.rel (%p363) target = $region73
                $region70: #{memory_cell_forward.1} parent=58 // loop_body
                  %v369 = vld [vmem:[%s367] sm:%s360]
                  %370 = vst [vmem:[%s368] sm:%s360] %v369
                  %v371 = vld [vmem:[%s367 + $0x8] sm:%s360]
                  %372 = vst [vmem:[%s368 + $0x4] sm:%s360] %v371
                  %v373 = vld [vmem:[%s367 + $0x10] sm:%s360]
                  %374 = vst [vmem:[%s368 + $0x8] sm:%s360] %v373
                  %v375 = vld [vmem:[%s367 + $0x18] sm:%s360]
                  %376 = vst [vmem:[%s368 + $0xc] sm:%s360] %v375
                  %v377 = vld [vmem:[%s367 + $0x20] sm:%s360]
                  %378 = vst [vmem:[%s368 + $0x10] sm:%s360] %v377
                  %v379 = vld [vmem:[%s367 + $0x28] sm:%s360]
                  %380 = vst [vmem:[%s368 + $0x14] sm:%s360] %v379
                  %v381 = vld [vmem:[%s367 + $0x30] sm:%s360]
                  %382 = vst [vmem:[%s368 + $0x18] sm:%s360] %v381
                  %v383 = vld [vmem:[%s367 + $0x38] sm:%s360]
                  %384 = vst [vmem:[%s368 + $0x1c] sm:%s360] %v383
                  %v385 = vld [vmem:[%s367 + $0x40] sm:%s360]
                  %386 = vst [vmem:[%s368 + $0x20] sm:%s360] %v385
                  %v387 = vld [vmem:[%s367 + $0x48] sm:%s360]
                  %388 = vst [vmem:[%s368 + $0x24] sm:%s360] %v387
                  %v389 = vld [vmem:[%s367 + $0x50] sm:%s360]
                  %390 = vst [vmem:[%s368 + $0x28] sm:%s360] %v389
                  %v391 = vld [vmem:[%s367 + $0x58] sm:%s360]
                  %392 = vst [vmem:[%s368 + $0x2c] sm:%s360] %v391
                  %v393 = vld [vmem:[%s367 + $0x60] sm:%s360]
                  %394 = vst [vmem:[%s368 + $0x30] sm:%s360] %v393
                  %v395 = vld [vmem:[%s367 + $0x68] sm:%s360]
                  %396 = vst [vmem:[%s368 + $0x34] sm:%s360] %v395
                  %v397 = vld [vmem:[%s367 + $0x70] sm:%s360]
                  %398 = vst [vmem:[%s368 + $0x38] sm:%s360] %v397
                  %v399 = vld [vmem:[%s367 + $0x78] sm:%s360]
                  %400 = vst [vmem:[%s368 + $0x3c] sm:%s360] %v399
                $region71: #{memory_cell_forward.1} parent=58 // loop_footer
                  %s366 = sadd.s32 1, %s362
                $region72: #{memory_cell_forward.1} parent=58 // loop_footer_branch
                  %361 = sbr.rel target = $region68
                $region73: #{memory_cell_forward.1} parent=58 // loop_exit
                  _
              $region59: #{memory_cell_forward.1} parent=43 // pred_fallthru
                _
            $region44: #{memory_cell_forward.1} parent=39 // pred_fallthru
              _
            // Predicated region
            $region45: #{memory_cell_forward.1} parent=39 // pred_check
              _
            $region46: #{memory_cell_forward.1} parent=39 // pred_check_branch
              %306 = sbr.rel (0) target = $region48
            $region47: #{memory_cell_forward.1} parent=39 // pred_region
              %s308 = ssub.s32 16, 1
              loop: start=0, step=1, limit=1
              $region49: #{memory_cell_forward.1} parent=47 // loop_pre_header
                _
              $region50: #{memory_cell_forward.1} parent=47 // loop_header
                %s310 = sphi 0, %s314
                %p311 = scmp.ge.s32.totalorder %s310, 1
                %s315 = sphi %s300, %s300
                %s316 = sphi %s298, %s298
              $region51: #{memory_cell_forward.1} parent=47 // loop_header_branch
                %313 = sbr.rel (%p311) target = $region55
              $region52: #{memory_cell_forward.1} parent=47 // loop_body
                %v317 = vld [vmem:[%s315] sm:%s308]
                %318 = vst [vmem:[%s316] sm:%s308] %v317
                %v319 = vld [vmem:[%s315 + $0x8] sm:%s308]
                %320 = vst [vmem:[%s316 + $0x4] sm:%s308] %v319
                %v321 = vld [vmem:[%s315 + $0x10] sm:%s308]
                %322 = vst [vmem:[%s316 + $0x8] sm:%s308] %v321
                %v323 = vld [vmem:[%s315 + $0x18] sm:%s308]
                %324 = vst [vmem:[%s316 + $0xc] sm:%s308] %v323
                %v325 = vld [vmem:[%s315 + $0x20] sm:%s308]
                %326 = vst [vmem:[%s316 + $0x10] sm:%s308] %v325
                %v327 = vld [vmem:[%s315 + $0x28] sm:%s308]
                %328 = vst [vmem:[%s316 + $0x14] sm:%s308] %v327
                %v329 = vld [vmem:[%s315 + $0x30] sm:%s308]
                %330 = vst [vmem:[%s316 + $0x18] sm:%s308] %v329
                %v331 = vld [vmem:[%s315 + $0x38] sm:%s308]
                %332 = vst [vmem:[%s316 + $0x1c] sm:%s308] %v331
                %v333 = vld [vmem:[%s315 + $0x40] sm:%s308]
                %334 = vst [vmem:[%s316 + $0x20] sm:%s308] %v333
                %v335 = vld [vmem:[%s315 + $0x48] sm:%s308]
                %336 = vst [vmem:[%s316 + $0x24] sm:%s308] %v335
                %v337 = vld [vmem:[%s315 + $0x50] sm:%s308]
                %338 = vst [vmem:[%s316 + $0x28] sm:%s308] %v337
                %v339 = vld [vmem:[%s315 + $0x58] sm:%s308]
                %340 = vst [vmem:[%s316 + $0x2c] sm:%s308] %v339
                %v341 = vld [vmem:[%s315 + $0x60] sm:%s308]
                %342 = vst [vmem:[%s316 + $0x30] sm:%s308] %v341
                %v343 = vld [vmem:[%s315 + $0x68] sm:%s308]
                %344 = vst [vmem:[%s316 + $0x34] sm:%s308] %v343
                %v345 = vld [vmem:[%s315 + $0x70] sm:%s308]
                %346 = vst [vmem:[%s316 + $0x38] sm:%s308] %v345
                %v347 = vld [vmem:[%s315 + $0x78] sm:%s308]
                %348 = vst [vmem:[%s316 + $0x3c] sm:%s308] %v347
              $region53: #{memory_cell_forward.1} parent=47 // loop_footer
                %s314 = sadd.s32 1, %s310
              $region54: #{memory_cell_forward.1} parent=47 // loop_footer_branch
                %309 = sbr.rel target = $region50
              $region55: #{memory_cell_forward.1} parent=47 // loop_exit
                _
            $region48: #{memory_cell_forward.1} parent=39 // pred_fallthru
              _
          $region40: #{memory_cell_forward.1} parent=35 // pred_fallthru
            _
          %401 = vnop
        $region36: #{memory_cell_forward.1} parent=23 // pred_fallthru
          _
        // Predicated region
        $region74: #{memory_cell_forward.1} parent=23 // pred_check
          %p402 = pneg %p167
        $region75: #{memory_cell_forward.1} parent=23 // pred_check_branch
          %404 = sbr.rel (%p402) target = $region77
        $region76: #{memory_cell_forward.1} parent=23 // pred_region
          %p405 = scmp.lt.s32.totalorder %s23, 1
          %s406 = scalar_select %p405, %s23, 1
          %s407 = scalar_lea.vmem %s5, %s406
        $region77: #{memory_cell_forward.1} parent=23 // pred_fallthru
          _
      $region24: #{memory_cell_forward.1} parent=5 // pred_fallthru
        _
      %p408 = scmp.le.s32.totalorder 1, %s15
      %p409 = scmp.lt.s32.totalorder %s15, 7
      %p410 = pnand %p408, %p409
      %p411 = pneg %p410
      // Predicated region
      $region78: #{memory_cell_forward.1} parent=5 // pred_check
        _
      $region79: #{memory_cell_forward.1} parent=5 // pred_check_branch
        %413 = sbr.rel (%p410) target = $region81
      $region80: #{memory_cell_forward.1} parent=5 // pred_region
        %s414 = ssub.s32 %s15, 1
        %s415 = sand.u32 %s134, 1
        %s416 = sand.u32 %s134, 1
        %s417 = smul.addr %s416, 64
        %s418 = scalar_lea.vmem [#allocation6], %s417
        // Predicated region
        $region82: #{memory_cell_forward.1} parent=80 // pred_check
          %p419 = pneg %p147
        $region83: #{memory_cell_forward.1} parent=80 // pred_check_branch
          %421 = sbr.rel (%p419) target = $region85
        $region84: #{memory_cell_forward.1} parent=80 // pred_region
          _
        $region85: #{memory_cell_forward.1} parent=80 // pred_fallthru
          _
        %p422 = scmp.lt.s32.totalorder %s24, 2
        %s423 = scalar_select %p422, %s24, 2
        %s424 = smul.addr %s423, 4
        %s425 = scalar_lea.vmem %s0, %s424
        %p426 = pneg %p53
        %p427 = pneg %p50
        %p428 = scmp.lt.s32.totalorder %s24, 2
        %s429 = scalar_select %p428, %s24, 2
        %s430 = smul.addr %s429, 8
        %s431 = scalar_lea.vmem %s1, %s430
        %p432 = pneg %p79
        %p433 = pneg %p76
        %p434 = pneg %p100
        %p435 = pneg %p97
        %p436 = pneg %p121
        %p437 = pneg %p118
        %s438 = sand.u32 %s134, 1
        %s439 = sand.u32 %s134, 1
        %s440 = smul.addr %s439, 64
        %s441 = scalar_lea.vmem [#allocation6], %s440
        %p442 = pneg %p147
        %p443 = pneg %p144
        %p444 = scmp.lt.s32.totalorder %s25, 1
        %s445 = scalar_select %p444, %s25, 1
        %s446 = scalar_lea.vmem %s5, %s445
        %p447 = pneg %p173
        %p448 = pneg %p170
        %p449 = pneg %p199
        %p450 = pneg %p196
        %p451 = scmp.lt.s32.totalorder %s24, 2
        %s452 = scalar_select %p451, %s24, 2
        %s453 = smul.addr %s452, 4
        %s454 = scalar_lea.vmem %s6, %s453
        %p455 = pneg %p227
        %p456 = pneg %p224
        %p457 = scmp.lt.s32.totalorder %s24, 2
        %s458 = scalar_select %p457, %s24, 2
        %p459 = scmp.lt.s32.totalorder %s25, 1
        %s460 = scalar_select %p459, %s25, 1
        %s461 = smul.addr %s458, 2
        %s462 = sadd.s32 %s460, %s461
        %s463 = smul.addr %s462, 4
        %s464 = scalar_lea.vmem %s7, %s463
        %p465 = pneg %p253
        %p466 = pneg %p250
        %p467 = scmp.lt.s32.totalorder %s24, 2
        %s468 = scalar_select %p467, %s24, 2
        %s469 = scalar_lea.vmem %s8, %s468
        %p470 = scmp.lt.s32.totalorder %s24, 2
        %s471 = scalar_select %p470, %s24, 2
        %s472 = smul.addr %s471, 4
        %s473 = scalar_lea.vmem %s0, %s472
        %p474 = scmp.lt.s32.totalorder %s24, 2
        %s475 = scalar_select %p474, %s24, 2
        %s476 = smul.addr %s475, 8
        %s477 = scalar_lea.vmem %s1, %s476
        %p478 = scmp.lt.s32.totalorder %s25, 1
        %s479 = scalar_select %p478, %s25, 1
        %s480 = scalar_lea.vmem %s5, %s479
        %p481 = scmp.lt.s32.totalorder %s24, 2
        %s482 = scalar_select %p481, %s24, 2
        %s483 = smul.addr %s482, 4
        %s484 = scalar_lea.vmem %s6, %s483
        %p485 = scmp.lt.s32.totalorder %s24, 2
        %s486 = scalar_select %p485, %s24, 2
        %p487 = scmp.lt.s32.totalorder %s25, 1
        %s488 = scalar_select %p487, %s25, 1
        %s489 = smul.addr %s486, 2
        %s490 = sadd.s32 %s488, %s489
        %s491 = smul.addr %s490, 4
        %s492 = scalar_lea.vmem %s7, %s491
        %p493 = scmp.lt.s32.totalorder %s24, 2
        %s494 = scalar_select %p493, %s24, 2
        %s495 = scalar_lea.vmem %s8, %s494
        %p497 = scmp.eq.s32.totalorder %s25, 0
        // Predicated region
        $region86: #{memory_cell_forward.1} parent=80 // pred_check
          %p498 = pneg %p497
        $region87: #{memory_cell_forward.1} parent=80 // pred_check_branch
          %500 = sbr.rel (%p498) target = $region89
        $region88: #{memory_cell_forward.1} parent=80 // pred_region
          %v501 = vld [vmem:[%s473] sm:$0xf]
          %v502 = vld [vmem:[%s2] sm:$0xf]
          %v503 = vld [vmem:[%s2 + $0x4] sm:$0xf]
          %v504 = vld [vmem:[%s2 + $0x8] sm:$0xf]
          %v505 = vld [vmem:[%s2 + $0xc] sm:$0xf]
          %v506 = vld [vmem:[%s2 + $0x10] sm:$0xf]
          %v507 = vld [vmem:[%s2 + $0x14] sm:$0xf]
          %v508 = vld [vmem:[%s2 + $0x18] sm:$0xf]
          %v509 = vld [vmem:[%s2 + $0x1c] sm:$0xf]
          %v510 = vld [vmem:[%s2 + $0x20] sm:$0xf]
          %v511 = vld [vmem:[%s2 + $0x24] sm:$0xf]
          %v512 = vld [vmem:[%s2 + $0x28] sm:$0xf]
          %v513 = vld [vmem:[%s2 + $0x2c] sm:$0xf]
          %v514 = vld [vmem:[%s2 + $0x30] sm:$0xf]
          %v515 = vld [vmem:[%s2 + $0x34] sm:$0xf]
          %v516 = vld [vmem:[%s2 + $0x38] sm:$0xf]
          %v517 = vld [vmem:[%s2 + $0x3c] sm:$0xf]
          %v518 = vld [vmem:[%s3] sm:$0x1]
          %v520 = vlaneseq
          %v521 = vshrl.u32 %v520, 7
          %v522 = vsub.s32 0, %v521
          %v523 = vrot.slane %v518, %v522
          %v541 = vunpack.c.l.b16 %v502
          %v542 = vunpack.c.l.b16 %v503
          %v543 = vunpack.c.l.b16 %v504
          %v544 = vunpack.c.l.b16 %v505
          %v545 = vunpack.c.l.b16 %v506
          %v546 = vunpack.c.l.b16 %v507
          %v547 = vunpack.c.l.b16 %v508
          %v548 = vunpack.c.l.b16 %v509
          %v549 = vunpack.c.l.b16 %v510
          %v550 = vunpack.c.l.b16 %v511
          %v551 = vunpack.c.l.b16 %v512
          %v552 = vunpack.c.l.b16 %v513
          %v553 = vunpack.c.l.b16 %v514
          %v554 = vunpack.c.l.b16 %v515
          %v555 = vunpack.c.l.b16 %v516
          %v556 = vunpack.c.l.b16 %v517
          %v557 = vpack.c.b16 %v542, %v541
          %v558 = vpack.c.b16 %v544, %v543
          %v559 = vpack.c.b16 %v546, %v545
          %v560 = vpack.c.b16 %v548, %v547
          %v561 = vpack.c.b16 %v550, %v549
          %v562 = vpack.c.b16 %v552, %v551
          %v563 = vpack.c.b16 %v554, %v553
          %v564 = vpack.c.b16 %v556, %v555
          %573 = vmatprep.subr.bf16.mxu0 0
          %574 = vmatpush1.bf16.msra.mxu0 %v564
          %575 = vmatprep.subr.bf16.mxu0 0
          %576 = vmatpush1.bf16.msra.mxu0 %v563
          %577 = vmatprep.subr.bf16.mxu0 0
          %578 = vmatpush1.bf16.msra.mxu0 %v562
          %579 = vmatprep.subr.bf16.mxu0 0
          %580 = vmatpush1.bf16.msra.mxu0 %v561
          %581 = vmatprep.subr.bf16.mxu0 0
          %582 = vmatpush1.bf16.msra.mxu0 %v560
          %583 = vmatprep.subr.bf16.mxu0 0
          %584 = vmatpush1.bf16.msra.mxu0 %v559
          %585 = vmatprep.subr.bf16.mxu0 0
          %586 = vmatpush1.bf16.msra.mxu0 %v558
          %587 = vmatprep.subr.bf16.mxu0 0
          %588 = vmatpush1.bf16.msra.mxu0 %v557
          %589 = vmatprep.subr.bf16.mxu0 0
          %590 = vmatpush2.bf16.msra.mxu0 0
          %591 = vmatprep.subr.bf16.mxu0 0
          %592 = vmatpush2.bf16.msra.mxu0 0
          %593 = vmatprep.subr.bf16.mxu0 0
          %594 = vmatpush2.bf16.msra.mxu0 0
          %595 = vmatprep.subr.bf16.mxu0 0
          %596 = vmatpush2.bf16.msra.mxu0 0
          %597 = vmatprep.subr.bf16.mxu0 0
          %598 = vmatpush2.bf16.msra.mxu0 0
          %599 = vmatprep.subr.bf16.mxu0 0
          %600 = vmatpush2.bf16.msra.mxu0 0
          %601 = vmatprep.subr.bf16.mxu0 0
          %602 = vmatpush2.bf16.msra.mxu0 0
          %603 = vmatprep.subr.bf16.mxu0 0
          %604 = vmatpush2.bf16.msra.mxu0 0
          %605 = vmatprep.mubr.bf16.mxu0 0
          %606 = vmatmul.mubr.bf16.gmra.mxu0 %v501
          %v607 = vpop.f32.mrf.mxu0
          %v608 = vadd.f32 %v523, %v607
          %v609 = vpop.f32.mrf.mxu0
          %v610 = vpop.f32.mrf.mxu0
          %v611 = vpop.f32.mrf.mxu0
          %612 = vdwg.mxu0
          %v613 = vmul.f32 %v608, %v608
          %v614 = vmul.f32 %v608, %v613
          %v615 = vmul.f32 %v614, 0.044715
          %v616 = vadd.f32 %v608, %v615
          %v617 = vmul.f32 %v616, 0.7978846
          %v618 = vtanh.pop %v617
          %v619 = vadd.f32 %v618, 1.0
          %v620 = vmul.f32 %v619, 0.5
          %v621 = vmul.f32 %v608, %v620
          %v622 = vpack.c.bf16 %v621, %v621
          %623 = vst [vmem:[#allocation2] sm:$0xf] %v622
          %624 = vst [vmem:[%s484] sm:$0xf] %v622
          %vm625 = vcmask 7168
          %626 = vst.msk [vmem:[#allocation3] sm:$0xff] %vm625, -inf
          %627 = vst.msk [vmem:[#allocation4] sm:$0xff] %vm625, 0.0
          %628 = vst.msk [vmem:[#allocation5] sm:$0xff] %vm625, 0.0
        $region89: #{memory_cell_forward.1} parent=80 // pred_fallthru
          _
        %v629 = vld [vmem:[#allocation2] sm:$0xf]
        %v630 = vld [vmem:[%s418] sm:$0xf]
        %v631 = vld [vmem:[%s418 + $0x4] sm:$0xf]
        %v632 = vld [vmem:[%s418 + $0x8] sm:$0xf]
        %v633 = vld [vmem:[%s418 + $0xc] sm:$0xf]
        %v634 = vld [vmem:[%s418 + $0x10] sm:$0xf]
        %v635 = vld [vmem:[%s418 + $0x14] sm:$0xf]
        %v636 = vld [vmem:[%s418 + $0x18] sm:$0xf]
        %v637 = vld [vmem:[%s418 + $0x1c] sm:$0xf]
        %v638 = vld [vmem:[%s418 + $0x20] sm:$0xf]
        %v639 = vld [vmem:[%s418 + $0x24] sm:$0xf]
        %v640 = vld [vmem:[%s418 + $0x28] sm:$0xf]
        %v641 = vld [vmem:[%s418 + $0x2c] sm:$0xf]
        %v642 = vld [vmem:[%s418 + $0x30] sm:$0xf]
        %v643 = vld [vmem:[%s418 + $0x34] sm:$0xf]
        %v644 = vld [vmem:[%s418 + $0x38] sm:$0xf]
        %v645 = vld [vmem:[%s418 + $0x3c] sm:$0xf]
        %v646 = vld [vmem:[%s480] sm:$0x1]
        %v648 = vlaneseq
        %v649 = vshrl.u32 %v648, 7
        %v650 = vsub.s32 0, %v649
        %v651 = vrot.slane %v646, %v650
        %v669 = vunpack.c.l.b16 %v630
        %v670 = vunpack.c.l.b16 %v631
        %v671 = vunpack.c.l.b16 %v632
        %v672 = vunpack.c.l.b16 %v633
        %v673 = vunpack.c.l.b16 %v634
        %v674 = vunpack.c.l.b16 %v635
        %v675 = vunpack.c.l.b16 %v636
        %v676 = vunpack.c.l.b16 %v637
        %v677 = vunpack.c.l.b16 %v638
        %v678 = vunpack.c.l.b16 %v639
        %v679 = vunpack.c.l.b16 %v640
        %v680 = vunpack.c.l.b16 %v641
        %v681 = vunpack.c.l.b16 %v642
        %v682 = vunpack.c.l.b16 %v643
        %v683 = vunpack.c.l.b16 %v644
        %v684 = vunpack.c.l.b16 %v645
        %v685 = vpack.c.b16 %v670, %v669
        %v686 = vpack.c.b16 %v672, %v671
        %v687 = vpack.c.b16 %v674, %v673
        %v688 = vpack.c.b16 %v676, %v675
        %v689 = vpack.c.b16 %v678, %v677
        %v690 = vpack.c.b16 %v680, %v679
        %v691 = vpack.c.b16 %v682, %v681
        %v692 = vpack.c.b16 %v684, %v683
        %701 = vmatprep.subr.bf16.mxu0 0
        %702 = vmatpush1.bf16.msra.mxu0 %v692
        %703 = vmatprep.subr.bf16.mxu0 0
        %704 = vmatpush1.bf16.msra.mxu0 %v691
        %705 = vmatprep.subr.bf16.mxu0 0
        %706 = vmatpush1.bf16.msra.mxu0 %v690
        %707 = vmatprep.subr.bf16.mxu0 0
        %708 = vmatpush1.bf16.msra.mxu0 %v689
        %709 = vmatprep.subr.bf16.mxu0 0
        %710 = vmatpush1.bf16.msra.mxu0 %v688
        %711 = vmatprep.subr.bf16.mxu0 0
        %712 = vmatpush1.bf16.msra.mxu0 %v687
        %713 = vmatprep.subr.bf16.mxu0 0
        %714 = vmatpush1.bf16.msra.mxu0 %v686
        %715 = vmatprep.subr.bf16.mxu0 0
        %716 = vmatpush1.bf16.msra.mxu0 %v685
        %717 = vmatprep.subr.bf16.mxu0 0
        %718 = vmatpush2.bf16.msra.mxu0 0
        %719 = vmatprep.subr.bf16.mxu0 0
        %720 = vmatpush2.bf16.msra.mxu0 0
        %721 = vmatprep.subr.bf16.mxu0 0
        %722 = vmatpush2.bf16.msra.mxu0 0
        %723 = vmatprep.subr.bf16.mxu0 0
        %724 = vmatpush2.bf16.msra.mxu0 0
        %725 = vmatprep.subr.bf16.mxu0 0
        %726 = vmatpush2.bf16.msra.mxu0 0
        %727 = vmatprep.subr.bf16.mxu0 0
        %728 = vmatpush2.bf16.msra.mxu0 0
        %729 = vmatprep.subr.bf16.mxu0 0
        %730 = vmatpush2.bf16.msra.mxu0 0
        %731 = vmatprep.subr.bf16.mxu0 0
        %732 = vmatpush2.bf16.msra.mxu0 0
        %733 = vmatprep.mubr.bf16.mxu0 0
        %734 = vmatmul.mubr.bf16.gmra.mxu0 %v629
        %v735 = vpop.f32.mrf.mxu0
        %v736 = vadd.f32 %v651, %v735
        %v737 = vpop.f32.mrf.mxu0
        %v738 = vpop.f32.mrf.mxu0
        %v739 = vpop.f32.mrf.mxu0
        %740 = vdwg.mxu0
        %v741 = vpack.c.bf16 %v736, %v736
        %742 = vst [vmem:[%s492] sm:$0xf] %v741
        %v743 = vld [vmem:[%s477] sm:$0xff]
        %v744 = vld [vmem:[#allocation3] sm:$0xff]
        %745 = vmax.xlane.f32.xlu0 %v736
        %v746 = vpop.xlane.xlu0 %745
        %v747 = vmax.f32 %v744, %v746
        %v748 = vsub.f32 %v744, %v747
        %v749 = vmul.f32 %v748, 1.442695
        %v750 = vpow.pop %v749
        %v751 = vld [vmem:[#allocation4] sm:$0xff]
        %v752 = vmul.f32 %v750, %v751
        %754 = vset.pattern.permute.xlu0 0
        %755 = vperm.xlu0 %754, %v747
        %v756 = vpop.permute.xlu0 %755
        %v758 = vsub.f32 %v736, %v756
        %v759 = vmul.f32 %v758, 1.442695
        %v760 = vpow.pop %v759
        %761 = vadd.xlane.f32.xlu0 %v760
        %v762 = vpop.xlane.xlu0 %761
        %v763 = vadd.f32 %v752, %v762
        %vm764 = vcmask 7168
        %765 = vst.msk [vmem:[#allocation4] sm:$0xff] %vm764, %v763
        %v766 = vlaneseq
        %v767 = vand.u32 %v766, 127
        %s768 = smul.u32 %s25, 128
        %v769 = vstv %s768
        %v770 = vadd.s32 %v767, %v769
        %v771 = vld [vmem:[#allocation5] sm:$0xff]
        %772 = vset.pattern.permute.xlu0 0
        %773 = vperm.xlu0 %772, %v743
        %v774 = vpop.permute.xlu0 %773
        %vm775 = vcmp.eq.s32.totalorder %v770, %v774
        %v776 = vsel %vm775, %v736, 0.0
        %777 = vadd.xlane.f32.xlu0 %v776
        %v778 = vpop.xlane.xlu0 %777
        %v779 = vadd.f32 %v771, %v778
        %780 = vst.msk [vmem:[#allocation5] sm:$0xff] %vm764, %v779
        %781 = vst.msk [vmem:[#allocation3] sm:$0xff] %vm764, %v747
        %p782 = scmp.eq.s32.totalorder %s25, 1
        // Predicated region
        $region90: #{memory_cell_forward.1} parent=80 // pred_check
          %p783 = pneg %p782
        $region91: #{memory_cell_forward.1} parent=80 // pred_check_branch
          %785 = sbr.rel (%p783) target = $region93
        $region92: #{memory_cell_forward.1} parent=80 // pred_region
          %vm786 = vcmp.ge.s32.totalorder %v743, 0
          %v787 = vld [vmem:[#allocation3] sm:$0xff]
          %v788 = vld [vmem:[#allocation4] sm:$0xff]
          %v789 = vlog2.pop %v788
          %v790 = vmul.f32 %v789, 0.6931472
          %v791 = vadd.f32 %v787, %v790
          %v792 = vld [vmem:[#allocation5] sm:$0xff]
          %v793 = vsub.f32 %v791, %v792
          %v794 = vsel %vm786, %v793, 0.0
          %v795 = vsel %vm764, %v794, 0.0
          %796 = vadd.xlane.f32.xlu0 %v795
          %v797 = vpop.xlane.xlu0 %796
          %v798 = vrot.slane %v797, 4
          %v799 = vadd.f32 %v797, %v798
          %v800 = vrot.slane %v799, 2
          %v801 = vadd.f32 %v799, %v800
          %v802 = vrot.slane %v801, 1
          %v803 = vadd.f32 %v801, %v802
          %s804 = vtos %v803
          %v805 = vstv %s804
          %806 = vst [vmem:[%s495] sm:$0x1] %v805
        $region93: #{memory_cell_forward.1} parent=80 // pred_fallthru
          _
        %p807 = scmp.lt.s32.totalorder %s24, 2
        %s808 = scalar_select %p807, %s24, 2
        %s809 = smul.addr %s808, 4
        %s810 = scalar_lea.vmem %s6, %s809
        %p811 = scmp.lt.s32.totalorder %s24, 2
        %s812 = scalar_select %p811, %s24, 2
        %p813 = scmp.lt.s32.totalorder %s25, 1
        %s814 = scalar_select %p813, %s25, 1
        %s815 = smul.addr %s812, 2
        %s816 = sadd.s32 %s814, %s815
        %s817 = smul.addr %s816, 4
        %s818 = scalar_lea.vmem %s7, %s817
        %p819 = scmp.lt.s32.totalorder %s24, 2
        %s820 = scalar_select %p819, %s24, 2
        %s821 = scalar_lea.vmem %s8, %s820
        // Predicated region
        $region94: #{memory_cell_forward.1} parent=80 // pred_check
          %p822 = pneg %p196
        $region95: #{memory_cell_forward.1} parent=80 // pred_check_branch
          %824 = sbr.rel (%p822) target = $region97
        $region96: #{memory_cell_forward.1} parent=80 // pred_region
          _
        $region97: #{memory_cell_forward.1} parent=80 // pred_fallthru
          _
        // Predicated region
        $region98: #{memory_cell_forward.1} parent=80 // pred_check
          %p825 = pneg %p224
        $region99: #{memory_cell_forward.1} parent=80 // pred_check_branch
          %827 = sbr.rel (%p825) target = $region101
        $region100: #{memory_cell_forward.1} parent=80 // pred_region
          _
        $region101: #{memory_cell_forward.1} parent=80 // pred_fallthru
          _
        // Predicated region
        $region102: #{memory_cell_forward.1} parent=80 // pred_check
          %p828 = pneg %p250
        $region103: #{memory_cell_forward.1} parent=80 // pred_check_branch
          %830 = sbr.rel (%p828) target = $region105
        $region104: #{memory_cell_forward.1} parent=80 // pred_region
          _
        $region105: #{memory_cell_forward.1} parent=80 // pred_fallthru
          _
      $region81: #{memory_cell_forward.1} parent=5 // pred_fallthru
        _
      %p831 = scmp.le.s32.totalorder 2, %s15
      // Predicated region
      $region106: #{memory_cell_forward.1} parent=5 // pred_check
        %p832 = pneg %p831
      $region107: #{memory_cell_forward.1} parent=5 // pred_check_branch
        %834 = sbr.rel (%p832) target = $region109
      $region108: #{memory_cell_forward.1} parent=5 // pred_region
        %s835 = ssub.s32 %s15, 2
        // Predicated region
        $region110: #{memory_cell_forward.1} parent=108 // pred_check
          %p836 = pneg %p202
        $region111: #{memory_cell_forward.1} parent=108 // pred_check_branch
          %838 = sbr.rel (%p836) target = $region113
        $region112: #{memory_cell_forward.1} parent=108 // pred_region
          %p839 = scmp.lt.s32.totalorder %s26, 2
          %s840 = scalar_select %p839, %s26, 2
          %s841 = smul.addr %s840, 4
          %s842 = scalar_lea.vmem %s6, %s841
        $region113: #{memory_cell_forward.1} parent=108 // pred_fallthru
          _
        // Predicated region
        $region114: #{memory_cell_forward.1} parent=108 // pred_check
          %p843 = pneg %p230
        $region115: #{memory_cell_forward.1} parent=108 // pred_check_branch
          %845 = sbr.rel (%p843) target = $region117
        $region116: #{memory_cell_forward.1} parent=108 // pred_region
          %p846 = scmp.lt.s32.totalorder %s26, 2
          %s847 = scalar_select %p846, %s26, 2
          %p848 = scmp.lt.s32.totalorder %s27, 1
          %s849 = scalar_select %p848, %s27, 1
          %s850 = smul.addr %s847, 2
          %s851 = sadd.s32 %s849, %s850
          %s852 = smul.addr %s851, 4
          %s853 = scalar_lea.vmem %s7, %s852
        $region117: #{memory_cell_forward.1} parent=108 // pred_fallthru
          _
        // Predicated region
        $region118: #{memory_cell_forward.1} parent=108 // pred_check
          %p854 = pneg %p256
        $region119: #{memory_cell_forward.1} parent=108 // pred_check_branch
          %856 = sbr.rel (%p854) target = $region121
        $region120: #{memory_cell_forward.1} parent=108 // pred_region
          %p857 = scmp.lt.s32.totalorder %s26, 2
          %s858 = scalar_select %p857, %s26, 2
          %s859 = scalar_lea.vmem %s8, %s858
        $region121: #{memory_cell_forward.1} parent=108 // pred_fallthru
          _
      $region109: #{memory_cell_forward.1} parent=5 // pred_fallthru
        _
    $region6: #{memory_cell_forward.1} parent=1 // loop_footer
      %s19 = sadd.s32 1, %s15
    $region7: #{memory_cell_forward.1} parent=1 // loop_footer_branch
      %14 = sbr.rel target = $region3
    $region8: #{memory_cell_forward.1} parent=1 // loop_exit
      _

</llo_original>
